<compile_context>
chip_gen: v7x
topology: tpu7x:2x2x1
jax: 0.10.0
libtpu: 0.0.40
codegen_flags: <defaults>
</compile_context>

<pallas_src>
import jax
import jax.numpy as jnp
from jax import lax
from jax.experimental import pallas as pl
from jax.experimental.pallas import tpu as pltpu


def convblock_forward(x, w1, b1, w2, b2):
    """x: (N, Cin, H, W) f32; w1: (C1, Cin, 3, 3); w2: (C2, C1, 3, 3). Returns (N, C2, H, W)."""
    N, Cin, H, W = x.shape
    C1 = w1.shape[0]
    C2 = w2.shape[0]

    def rup(v, m):
        return (v + m - 1) // m * m

    Cin_p, C1_p, C2_p = rup(Cin, 8), rup(C1, 8), rup(C2, 8)
    Hp, Wp = H + 2, W + 2
    HWp = H * Wp            # conv2 output columns (last 2 of each Wp-wide row are junk, cropped later)
    L = Hp * Wp + 2         # conv1 output columns == conv2 (pre-shifted, padded) input columns
    L2 = L + 2 * Wp + 2     # flattened, shifted, slack-padded input length

    # ---------------- wrapper-side layout glue (cheap XLA ops) ----------------
    # channels -> multiple of 8 (sublane aligned), spatial zero-pad 1, flatten (Hp, Wp) onto
    # the lane axis, shift right by Wp+1 (so conv1's output lands pre-shifted as conv2's
    # zero-padded input) and add slack zeros so every 3x3 tap window stays in bounds.
    xp = jnp.pad(x, ((0, 0), (0, Cin_p - Cin), (1, 1), (1, 1)))          # (N, Cin_p, Hp, Wp)
    xpf = jnp.pad(xp.reshape(N, Cin_p, Hp * Wp),
                  ((0, 0), (0, 0), (Wp + 1, Wp + 3)))                    # (N, Cin_p, L2)

    # weights as (Cout_p, 9*Cin_p) im2col matrices, row order (kh, kw, ci)
    w1p = jnp.pad(w1, ((0, C1_p - C1), (0, Cin_p - Cin), (0, 0), (0, 0)))
    w2p = jnp.pad(w2, ((0, C2_p - C2), (0, C1_p - C1), (0, 0), (0, 0)))
    w1m = jnp.transpose(w1p, (0, 2, 3, 1)).reshape(C1_p, 9 * Cin_p)
    w2m = jnp.transpose(w2p, (0, 2, 3, 1)).reshape(C2_p, 9 * C1_p)
    b1c = jnp.pad(b1, (0, C1_p - C1)).reshape(C1_p, 1).astype(jnp.float32)
    b2c = jnp.pad(b2, (0, C2_p - C2)).reshape(C2_p, 1).astype(jnp.float32)

    # 0/1 mask: columns of the pre-shifted conv1 output that are real pixels; all other
    # columns must be exactly 0 (they are conv2's zero padding / cross-row junk).
    t = jnp.arange(L, dtype=jnp.int32)
    j = t - (Wp + 1)
    mask = (((j >= 0) & (j < HWp) & ((j % Wp) < W))
            .astype(jnp.float32).reshape(1, L))

    # ---------------- fused kernel ----------------
    def kernel(x_ref, w1_ref, b1_ref, w2_ref, b2_ref, m_ref, o_ref):
        xf = x_ref[...]                                          # (Cin_p, L2)

        # conv1: 9 static lane-offset windows -> one (9*Cin_p, L) patch matrix -> one MXU matmul
        p1 = jnp.concatenate(
            [xf[:, kh * Wp + kw: kh * Wp + kw + L]
             for kh in range(3) for kw in range(3)], axis=0)
        y = jnp.dot(w1_ref[...], p1, preferred_element_type=jnp.float32)
        y = jnp.maximum(y + b1_ref[...], 0.0) * m_ref[...]       # ReLU + zero the padding/junk cols
        # y (C1_p, L) is now exactly conv2's zero-padded, flattened input.

        # conv2: same im2col trick on the VMEM-resident intermediate
        p2 = jnp.concatenate(
            [y[:, kh * Wp + kw: kh * Wp + kw + HWp]
             for kh in range(3) for kw in range(3)], axis=0)
        z = jnp.dot(w2_ref[...], p2, preferred_element_type=jnp.float32)
        z = jnp.maximum(z + b2_ref[...], 0.0)                    # ReLU
        o_ref[...] = z.astype(o_ref.dtype)                       # lane-dense store (HWp lanes)

    out_flat = pl.pallas_call(
        kernel,
        out_shape=jax.ShapeDtypeStruct((N, C2_p, HWp), x.dtype),
        grid_spec=pltpu.PrefetchScalarGridSpec(
            num_scalar_prefetch=0,
            grid=(N,),
            in_specs=[
                pl.BlockSpec((None, Cin_p, L2), lambda n: (n, 0, 0)),
                pl.BlockSpec((C1_p, 9 * Cin_p), lambda n: (0, 0)),
                pl.BlockSpec((C1_p, 1), lambda n: (0, 0)),
                pl.BlockSpec((C2_p, 9 * C1_p), lambda n: (0, 0)),
                pl.BlockSpec((C2_p, 1), lambda n: (0, 0)),
                pl.BlockSpec((1, L), lambda n: (0, 0)),
            ],
            out_specs=pl.BlockSpec((None, C2_p, HWp), lambda n: (n, 0, 0)),
        ),
        compiler_params=pltpu.CompilerParams(
            dimension_semantics=("parallel",)),
    )(xpf, w1m, b1c, w2m, b2c, mask)

    # drop channel padding, crop the 2 junk columns per flat row, back to NCHW
    return out_flat.reshape(N, C2_p, H, Wp)[:, :C2, :, :W]


def _reference(x, w1, b1, w2, b2):
    def conv(v, w, b):
        y = lax.conv_general_dilated(
            v, w, window_strides=(1, 1), padding=((1, 1), (1, 1)),
            dimension_numbers=("NCHW", "OIHW", "NCHW"))
        return y + b[None, :, None, None]
    y = jnp.maximum(conv(x, w1, b1), 0.0)
    return jnp.maximum(conv(y, w2, b2), 0.0)


if __name__ == "__main__":
    key = jax.random.PRNGKey(0)
    kx, kw1, kb1, kw2, kb2 = jax.random.split(key, 5)

    N, Cin, H, W = 2, 4, 16, 16
    Cout = 8  # ConvBlock: in_channel -> out_channel -> out_channel

    x = jax.random.normal(kx, (N, Cin, H, W), dtype=jnp.float32)
    w1 = 0.1 * jax.random.normal(kw1, (Cout, Cin, 3, 3), dtype=jnp.float32)
    b1 = 0.1 * jax.random.normal(kb1, (Cout,), dtype=jnp.float32)
    w2 = 0.1 * jax.random.normal(kw2, (Cout, Cout, 3, 3), dtype=jnp.float32)
    b2 = 0.1 * jax.random.normal(kb2, (Cout,), dtype=jnp.float32)

    out = jax.jit(convblock_forward)(x, w1, b1, w2, b2)
    out = jax.block_until_ready(out)

    ref = _reference(x, w1, b1, w2, b2)
    assert out.shape == (N, Cout, H, W), out.shape
    err = float(jnp.max(jnp.abs(out - ref)))
    assert jnp.allclose(out, ref, atol=1e-3, rtol=1e-3), err
    print("KERNEL_OK")
</pallas_src>

<mosaic_0001>
module attributes {stable_mosaic.version = 11 : i64} {
  func.func @kernel(%arg0: i32, %arg1: memref<1x8x364xf32, #tpu.memory_space<vmem>>, %arg2: memref<8x72xf32, #tpu.memory_space<vmem>>, %arg3: memref<8x1xf32, #tpu.memory_space<vmem>>, %arg4: memref<8x72xf32, #tpu.memory_space<vmem>>, %arg5: memref<8x1xf32, #tpu.memory_space<vmem>>, %arg6: memref<1x326xf32, #tpu.memory_space<vmem>>, %arg7: memref<1x8x288xf32, #tpu.memory_space<vmem>>) attributes {dimension_semantics = [#tpu.dimension_semantics<parallel>], iteration_bounds = array<i64: 2>, scalar_prefetch = 0 : i64, scratch_operands = 0 : i64, tpu.core_type = #tpu.core_type<tc>, window_params = [{transform_indices = @transform_0, window_bounds = array<i64: 1, 8, 364>}, {pipeline_mode = #tpu.pipeline_mode<synchronous>, transform_indices = @transform_1, window_bounds = array<i64: 8, 72>}, {pipeline_mode = #tpu.pipeline_mode<synchronous>, transform_indices = @transform_2, window_bounds = array<i64: 8, 1>}, {pipeline_mode = #tpu.pipeline_mode<synchronous>, transform_indices = @transform_3, window_bounds = array<i64: 8, 72>}, {pipeline_mode = #tpu.pipeline_mode<synchronous>, transform_indices = @transform_4, window_bounds = array<i64: 8, 1>}, {pipeline_mode = #tpu.pipeline_mode<synchronous>, transform_indices = @transform_5, window_bounds = array<i64: 1, 326>}, {transform_indices = @transform_6, window_bounds = array<i64: 1, 8, 288>}]} {
    %c0 = arith.constant 0 : index
    %c0_0 = arith.constant 0 : index
    %c0_1 = arith.constant 0 : index
    %0 = vector.load %arg1[%c0, %c0_0, %c0_1] : memref<1x8x364xf32, #tpu.memory_space<vmem>>, vector<1x8x364xf32>
    %1 = vector.shape_cast %0 : vector<1x8x364xf32> to vector<8x364xf32>
    %2 = vector.extract_strided_slice %1 {offsets = [0, 0], sizes = [8, 326], strides = [1, 1]} : vector<8x364xf32> to vector<8x326xf32>
    %3 = vector.extract_strided_slice %1 {offsets = [0, 1], sizes = [8, 326], strides = [1, 1]} : vector<8x364xf32> to vector<8x326xf32>
    %4 = vector.extract_strided_slice %1 {offsets = [0, 2], sizes = [8, 326], strides = [1, 1]} : vector<8x364xf32> to vector<8x326xf32>
    %5 = vector.extract_strided_slice %1 {offsets = [0, 18], sizes = [8, 326], strides = [1, 1]} : vector<8x364xf32> to vector<8x326xf32>
    %6 = vector.extract_strided_slice %1 {offsets = [0, 19], sizes = [8, 326], strides = [1, 1]} : vector<8x364xf32> to vector<8x326xf32>
    %7 = vector.extract_strided_slice %1 {offsets = [0, 20], sizes = [8, 326], strides = [1, 1]} : vector<8x364xf32> to vector<8x326xf32>
    %8 = vector.extract_strided_slice %1 {offsets = [0, 36], sizes = [8, 326], strides = [1, 1]} : vector<8x364xf32> to vector<8x326xf32>
    %9 = vector.extract_strided_slice %1 {offsets = [0, 37], sizes = [8, 326], strides = [1, 1]} : vector<8x364xf32> to vector<8x326xf32>
    %10 = vector.extract_strided_slice %1 {offsets = [0, 38], sizes = [8, 326], strides = [1, 1]} : vector<8x364xf32> to vector<8x326xf32>
    %11 = tpu.concatenate %2, %3, %4, %5, %6, %7, %8, %9, %10 in 0 : vector<8x326xf32>, vector<8x326xf32>, vector<8x326xf32>, vector<8x326xf32>, vector<8x326xf32>, vector<8x326xf32>, vector<8x326xf32>, vector<8x326xf32>, vector<8x326xf32> -> vector<72x326xf32>
    %c0_2 = arith.constant 0 : index
    %c0_3 = arith.constant 0 : index
    %12 = vector.load %arg2[%c0_2, %c0_3] : memref<8x72xf32, #tpu.memory_space<vmem>>, vector<8x72xf32>
    %cst = arith.constant dense<0.000000e+00> : vector<8x326xf32>
    %13 = tpu.matmul %12, %11, %cst {dimension_numbers = #tpu.dot_dimension_numbers<[1], [0], [0], [1], [0, 0, 1, 1], [], []>} : vector<8x72xf32>, vector<72x326xf32>, vector<8x326xf32> -> vector<8x326xf32>
    %c0_4 = arith.constant 0 : index
    %c0_5 = arith.constant 0 : index
    %14 = vector.load %arg3[%c0_4, %c0_5] : memref<8x1xf32, #tpu.memory_space<vmem>>, vector<8x1xf32>
    %15 = vector.broadcast %14 : vector<8x1xf32> to vector<8x326xf32>
    %16 = arith.addf %13, %15 : vector<8x326xf32>
    %cst_6 = arith.constant 0.000000e+00 : f32
    %17 = vector.broadcast %cst_6 : f32 to vector<8x326xf32>
    %18 = arith.maximumf %16, %17 : vector<8x326xf32>
    %c0_7 = arith.constant 0 : index
    %c0_8 = arith.constant 0 : index
    %19 = vector.load %arg6[%c0_7, %c0_8] : memref<1x326xf32, #tpu.memory_space<vmem>>, vector<1x326xf32>
    %20 = vector.broadcast %19 : vector<1x326xf32> to vector<8x326xf32>
    %21 = arith.mulf %18, %20 : vector<8x326xf32>
    %22 = vector.extract_strided_slice %21 {offsets = [0, 0], sizes = [8, 288], strides = [1, 1]} : vector<8x326xf32> to vector<8x288xf32>
    %23 = vector.extract_strided_slice %21 {offsets = [0, 1], sizes = [8, 288], strides = [1, 1]} : vector<8x326xf32> to vector<8x288xf32>
    %24 = vector.extract_strided_slice %21 {offsets = [0, 2], sizes = [8, 288], strides = [1, 1]} : vector<8x326xf32> to vector<8x288xf32>
    %25 = vector.extract_strided_slice %21 {offsets = [0, 18], sizes = [8, 288], strides = [1, 1]} : vector<8x326xf32> to vector<8x288xf32>
    %26 = vector.extract_strided_slice %21 {offsets = [0, 19], sizes = [8, 288], strides = [1, 1]} : vector<8x326xf32> to vector<8x288xf32>
    %27 = vector.extract_strided_slice %21 {offsets = [0, 20], sizes = [8, 288], strides = [1, 1]} : vector<8x326xf32> to vector<8x288xf32>
    %28 = vector.extract_strided_slice %21 {offsets = [0, 36], sizes = [8, 288], strides = [1, 1]} : vector<8x326xf32> to vector<8x288xf32>
    %29 = vector.extract_strided_slice %21 {offsets = [0, 37], sizes = [8, 288], strides = [1, 1]} : vector<8x326xf32> to vector<8x288xf32>
    %30 = vector.extract_strided_slice %21 {offsets = [0, 38], sizes = [8, 288], strides = [1, 1]} : vector<8x326xf32> to vector<8x288xf32>
    %31 = tpu.concatenate %22, %23, %24, %25, %26, %27, %28, %29, %30 in 0 : vector<8x288xf32>, vector<8x288xf32>, vector<8x288xf32>, vector<8x288xf32>, vector<8x288xf32>, vector<8x288xf32>, vector<8x288xf32>, vector<8x288xf32>, vector<8x288xf32> -> vector<72x288xf32>
    %c0_9 = arith.constant 0 : index
    %c0_10 = arith.constant 0 : index
    %32 = vector.load %arg4[%c0_9, %c0_10] : memref<8x72xf32, #tpu.memory_space<vmem>>, vector<8x72xf32>
    %cst_11 = arith.constant dense<0.000000e+00> : vector<8x288xf32>
    %33 = tpu.matmul %32, %31, %cst_11 {dimension_numbers = #tpu.dot_dimension_numbers<[1], [0], [0], [1], [0, 0, 1, 1], [], []>} : vector<8x72xf32>, vector<72x288xf32>, vector<8x288xf32> -> vector<8x288xf32>
    %c0_12 = arith.constant 0 : index
    %c0_13 = arith.constant 0 : index
    %34 = vector.load %arg5[%c0_12, %c0_13] : memref<8x1xf32, #tpu.memory_space<vmem>>, vector<8x1xf32>
    %35 = vector.broadcast %34 : vector<8x1xf32> to vector<8x288xf32>
    %36 = arith.addf %33, %35 : vector<8x288xf32>
    %cst_14 = arith.constant 0.000000e+00 : f32
    %37 = vector.broadcast %cst_14 : f32 to vector<8x288xf32>
    %38 = arith.maximumf %36, %37 : vector<8x288xf32>
    %c0_15 = arith.constant 0 : index
    %c0_16 = arith.constant 0 : index
    %c0_17 = arith.constant 0 : index
    %39 = vector.load %arg7[%c0_15, %c0_16, %c0_17] : memref<1x8x288xf32, #tpu.memory_space<vmem>>, vector<1x8x288xf32>
    %40 = vector.shape_cast %39 : vector<1x8x288xf32> to vector<8x288xf32>
    %41 = vector.shape_cast %38 : vector<8x288xf32> to vector<1x8x288xf32>
    tpu.vector_store %arg7[%c0_15, %c0_16, %c0_17], %41 {strides = array<i32>} : memref<1x8x288xf32, #tpu.memory_space<vmem>>, vector<1x8x288xf32>,
    return
  }
  func.func @transform_0(%arg0: i32) -> (i32, i32, i32) {
    %c0_i32 = arith.constant 0 : i32
    %c0_i32_0 = arith.constant 0 : i32
    %c0_i32_1 = arith.constant 0 : i32
    return %arg0, %c0_i32, %c0_i32_0 : i32, i32, i32
  }
  func.func @transform_1(%arg0: i32) -> (i32, i32) {
    %c0_i32 = arith.constant 0 : i32
    %c0_i32_0 = arith.constant 0 : i32
    %c0_i32_1 = arith.constant 0 : i32
    return %c0_i32, %c0_i32_0 : i32, i32
  }
  func.func @transform_2(%arg0: i32) -> (i32, i32) {
    %c0_i32 = arith.constant 0 : i32
    %c0_i32_0 = arith.constant 0 : i32
    %c0_i32_1 = arith.constant 0 : i32
    return %c0_i32, %c0_i32_0 : i32, i32
  }
  func.func @transform_3(%arg0: i32) -> (i32, i32) {
    %c0_i32 = arith.constant 0 : i32
    %c0_i32_0 = arith.constant 0 : i32
    %c0_i32_1 = arith.constant 0 : i32
    return %c0_i32, %c0_i32_0 : i32, i32
  }
  func.func @transform_4(%arg0: i32) -> (i32, i32) {
    %c0_i32 = arith.constant 0 : i32
    %c0_i32_0 = arith.constant 0 : i32
    %c0_i32_1 = arith.constant 0 : i32
    return %c0_i32, %c0_i32_0 : i32, i32
  }
  func.func @transform_5(%arg0: i32) -> (i32, i32) {
    %c0_i32 = arith.constant 0 : i32
    %c0_i32_0 = arith.constant 0 : i32
    %c0_i32_1 = arith.constant 0 : i32
    return %c0_i32, %c0_i32_0 : i32, i32
  }
  func.func @transform_6(%arg0: i32) -> (i32, i32, i32) {
    %c0_i32 = arith.constant 0 : i32
    %c0_i32_0 = arith.constant 0 : i32
    %c0_i32_1 = arith.constant 0 : i32
    return %arg0, %c0_i32, %c0_i32_0 : i32, i32, i32
  }
}

</mosaic_0001>

<llo_original>
// kernel: convblock_forward.1
$region0: #{convblock_forward.1}
  #allocation0 [shape = 'u32[]', space=smem, size = 0x4, offset = 0x4, fixed_abs, tag = 'smem constant byte address 0x4 - core index']
  #allocation1 [shape = 'u32[144,128]{1,0:T(1,128)}', space=vmem, size = 0x12000, scoped, tag = 'internal scratch']
  %s0 = inlined_call_operand.vmem [shape: f32[2,8,364], index: 0, kind: input, shape index: {}]
  %s1 = inlined_call_operand.vmem [shape: f32[8,72], index: 1, kind: input, shape index: {}]
  %s2 = inlined_call_operand.vmem [shape: f32[8,1], index: 2, kind: input, shape index: {}]
  %s3 = inlined_call_operand.vmem [shape: f32[8,72], index: 3, kind: input, shape index: {}]
  %s4 = inlined_call_operand.vmem [shape: f32[8,1], index: 4, kind: input, shape index: {}]
  %s5 = inlined_call_operand.vmem [shape: f32[1,326], index: 5, kind: input, shape index: {}]
  %s6 = inlined_call_operand.vmem [shape: f32[2,8,288], index: 6, kind: output, shape index: {}]
  %s7 = sld [smem:[#allocation0]]
  $region57: #{convblock_forward.1} parent=0
    _
  %s9 = ssub.s32 1, %s7
  %s10 = scalar_select 0, %s9, %s7
  loop: start=0, step=1, limit=4
  $region2: #{convblock_forward.1} parent=0 // loop_pre_header
    _
  $region3: #{convblock_forward.1} parent=0 // loop_header
    %s12 = sphi 0, %s16
    %p13 = scmp.ge.s32.totalorder %s12, 4
    %s22 = sphi 0, %s24
    %s25 = sphi 0, %s22
    %s26 = sphi 0, %s25
    %s42 = sphi 0, %s26
    %s46 = sphi 0, %s46
    %s48 = sphi 0, %s46
    %s49 = sphi 0, %s48
    %s63 = sphi 0, %s49
    %s67 = sphi 0, %s67
    %s69 = sphi 0, %s67
    %s70 = sphi 0, %s69
    %s84 = sphi 0, %s70
    %s88 = sphi 0, %s88
    %s90 = sphi 0, %s88
    %s91 = sphi 0, %s90
    %s105 = sphi 0, %s91
    %s109 = sphi 0, %s109
    %s111 = sphi 0, %s109
    %s112 = sphi 0, %s111
    %s126 = sphi 0, %s112
    %s130 = sphi 0, %s130
    %s132 = sphi 0, %s130
    %s133 = sphi 0, %s132
    %s147 = sphi 0, %s133
    %s153 = sphi 0, %s155
    %s156 = sphi 0, %s153
    %s157 = sphi 0, %s156
    %s173 = sphi 0, %s157
  $region4: #{convblock_forward.1} parent=0 // loop_header_branch
    %15 = sbr.rel (%p13) target = $region8
  $region5: #{convblock_forward.1} parent=0 // loop_body
    %s17 = ssub.s32 %s12, 1
    %s18 = ssub.s32 %s12, 2
    %s19 = sadd.s32 %s12, 1
    %s20 = ssub.s32 %s12, %s19
    %p21 = scmp.eq.s32.totalorder %s20, 0
    %s23 = sadd.s32 %s22, 1
    %s24 = scalar_select %p21, %s22, %s23
    %p27 = pneg %p21
    %p28 = scmp.eq.s32.totalorder %s12, 1
    %p29 = por %p27, %p28
    %p30 = scmp.ne.s32.totalorder %s22, %s25
    %p31 = scmp.eq.s32.totalorder %s12, 0
    %p32 = por %p30, %p31
    %p33 = scmp.ne.s32.totalorder %s22, %s25
    %p34 = scmp.eq.s32.totalorder %s17, 1
    %p35 = por %p33, %p34
    %p36 = scmp.ne.s32.totalorder %s25, %s26
    %p37 = scmp.eq.s32.totalorder %s17, 0
    %p38 = por %p36, %p37
    %p39 = scmp.ne.s32.totalorder %s25, %s26
    %p40 = scmp.eq.s32.totalorder %s18, 1
    %p41 = por %p39, %p40
    %p43 = scmp.ne.s32.totalorder %s26, %s42
    %p44 = scmp.eq.s32.totalorder %s18, 0
    %p45 = por %p43, %p44
    %s47 = sadd.s32 %s46, 1
    %p50 = scmp.eq.s32.totalorder %s12, 1
    %p51 = scmp.ne.s32.totalorder %s46, %s48
    %p52 = scmp.eq.s32.totalorder %s12, 0
    %p53 = por %p51, %p52
    %p54 = scmp.ne.s32.totalorder %s46, %s48
    %p55 = scmp.eq.s32.totalorder %s17, 1
    %p56 = por %p54, %p55
    %p57 = scmp.ne.s32.totalorder %s48, %s49
    %p58 = scmp.eq.s32.totalorder %s17, 0
    %p59 = por %p57, %p58
    %p60 = scmp.ne.s32.totalorder %s48, %s49
    %p61 = scmp.eq.s32.totalorder %s18, 1
    %p62 = por %p60, %p61
    %p64 = scmp.ne.s32.totalorder %s49, %s63
    %p65 = scmp.eq.s32.totalorder %s18, 0
    %p66 = por %p64, %p65
    %s68 = sadd.s32 %s67, 1
    %p71 = scmp.eq.s32.totalorder %s12, 1
    %p72 = scmp.ne.s32.totalorder %s67, %s69
    %p73 = scmp.eq.s32.totalorder %s12, 0
    %p74 = por %p72, %p73
    %p75 = scmp.ne.s32.totalorder %s67, %s69
    %p76 = scmp.eq.s32.totalorder %s17, 1
    %p77 = por %p75, %p76
    %p78 = scmp.ne.s32.totalorder %s69, %s70
    %p79 = scmp.eq.s32.totalorder %s17, 0
    %p80 = por %p78, %p79
    %p81 = scmp.ne.s32.totalorder %s69, %s70
    %p82 = scmp.eq.s32.totalorder %s18, 1
    %p83 = por %p81, %p82
    %p85 = scmp.ne.s32.totalorder %s70, %s84
    %p86 = scmp.eq.s32.totalorder %s18, 0
    %p87 = por %p85, %p86
    %s89 = sadd.s32 %s88, 1
    %p92 = scmp.eq.s32.totalorder %s12, 1
    %p93 = scmp.ne.s32.totalorder %s88, %s90
    %p94 = scmp.eq.s32.totalorder %s12, 0
    %p95 = por %p93, %p94
    %p96 = scmp.ne.s32.totalorder %s88, %s90
    %p97 = scmp.eq.s32.totalorder %s17, 1
    %p98 = por %p96, %p97
    %p99 = scmp.ne.s32.totalorder %s90, %s91
    %p100 = scmp.eq.s32.totalorder %s17, 0
    %p101 = por %p99, %p100
    %p102 = scmp.ne.s32.totalorder %s90, %s91
    %p103 = scmp.eq.s32.totalorder %s18, 1
    %p104 = por %p102, %p103
    %p106 = scmp.ne.s32.totalorder %s91, %s105
    %p107 = scmp.eq.s32.totalorder %s18, 0
    %p108 = por %p106, %p107
    %s110 = sadd.s32 %s109, 1
    %p113 = scmp.eq.s32.totalorder %s12, 1
    %p114 = scmp.ne.s32.totalorder %s109, %s111
    %p115 = scmp.eq.s32.totalorder %s12, 0
    %p116 = por %p114, %p115
    %p117 = scmp.ne.s32.totalorder %s109, %s111
    %p118 = scmp.eq.s32.totalorder %s17, 1
    %p119 = por %p117, %p118
    %p120 = scmp.ne.s32.totalorder %s111, %s112
    %p121 = scmp.eq.s32.totalorder %s17, 0
    %p122 = por %p120, %p121
    %p123 = scmp.ne.s32.totalorder %s111, %s112
    %p124 = scmp.eq.s32.totalorder %s18, 1
    %p125 = por %p123, %p124
    %p127 = scmp.ne.s32.totalorder %s112, %s126
    %p128 = scmp.eq.s32.totalorder %s18, 0
    %p129 = por %p127, %p128
    %s131 = sadd.s32 %s130, 1
    %p134 = scmp.eq.s32.totalorder %s12, 1
    %p135 = scmp.ne.s32.totalorder %s130, %s132
    %p136 = scmp.eq.s32.totalorder %s12, 0
    %p137 = por %p135, %p136
    %p138 = scmp.ne.s32.totalorder %s130, %s132
    %p139 = scmp.eq.s32.totalorder %s17, 1
    %p140 = por %p138, %p139
    %p141 = scmp.ne.s32.totalorder %s132, %s133
    %p142 = scmp.eq.s32.totalorder %s17, 0
    %p143 = por %p141, %p142
    %p144 = scmp.ne.s32.totalorder %s132, %s133
    %p145 = scmp.eq.s32.totalorder %s18, 1
    %p146 = por %p144, %p145
    %p148 = scmp.ne.s32.totalorder %s133, %s147
    %p149 = scmp.eq.s32.totalorder %s18, 0
    %p150 = por %p148, %p149
    %s151 = ssub.s32 %s12, %s19
    %p152 = scmp.eq.s32.totalorder %s151, 0
    %s154 = sadd.s32 %s153, 1
    %s155 = scalar_select %p152, %s153, %s154
    %p158 = pneg %p152
    %p159 = scmp.eq.s32.totalorder %s12, 1
    %p160 = por %p158, %p159
    %p161 = scmp.ne.s32.totalorder %s153, %s156
    %p162 = scmp.eq.s32.totalorder %s12, 0
    %p163 = por %p161, %p162
    %p164 = scmp.ne.s32.totalorder %s153, %s156
    %p165 = scmp.eq.s32.totalorder %s17, 1
    %p166 = por %p164, %p165
    %p167 = scmp.ne.s32.totalorder %s156, %s157
    %p168 = scmp.eq.s32.totalorder %s17, 0
    %p169 = por %p167, %p168
    %p170 = scmp.ne.s32.totalorder %s156, %s157
    %p171 = scmp.eq.s32.totalorder %s18, 1
    %p172 = por %p170, %p171
    %p174 = scmp.ne.s32.totalorder %s157, %s173
    %p175 = scmp.eq.s32.totalorder %s18, 0
    %p176 = por %p174, %p175
    %p177 = scmp.le.s32.totalorder 1, %s12
    %p178 = scmp.lt.s32.totalorder %s12, 3
    %p179 = pnand %p177, %p178
    %p180 = pneg %p179
    // Predicated region
    $region9: #{convblock_forward.1} parent=5 // pred_check
      _
    $region10: #{convblock_forward.1} parent=5 // pred_check_branch
      %182 = sbr.rel (%p179) target = $region12
    $region11: #{convblock_forward.1} parent=5 // pred_region
      %s183 = ssub.s32 %s12, 1
      // Predicated region
      $region13: #{convblock_forward.1} parent=11 // pred_check
        %p184 = pneg %p59
      $region14: #{convblock_forward.1} parent=11 // pred_check_branch
        %186 = sbr.rel (%p184) target = $region16
      $region15: #{convblock_forward.1} parent=11 // pred_region
        _
      $region16: #{convblock_forward.1} parent=11 // pred_fallthru
        _
      // Predicated region
      $region17: #{convblock_forward.1} parent=11 // pred_check
        %p187 = pneg %p80
      $region18: #{convblock_forward.1} parent=11 // pred_check_branch
        %189 = sbr.rel (%p187) target = $region20
      $region19: #{convblock_forward.1} parent=11 // pred_region
        _
      $region20: #{convblock_forward.1} parent=11 // pred_fallthru
        _
      // Predicated region
      $region21: #{convblock_forward.1} parent=11 // pred_check
        %p190 = pneg %p101
      $region22: #{convblock_forward.1} parent=11 // pred_check_branch
        %192 = sbr.rel (%p190) target = $region24
      $region23: #{convblock_forward.1} parent=11 // pred_region
        _
      $region24: #{convblock_forward.1} parent=11 // pred_fallthru
        _
      // Predicated region
      $region25: #{convblock_forward.1} parent=11 // pred_check
        %p193 = pneg %p122
      $region26: #{convblock_forward.1} parent=11 // pred_check_branch
        %195 = sbr.rel (%p193) target = $region28
      $region27: #{convblock_forward.1} parent=11 // pred_region
        _
      $region28: #{convblock_forward.1} parent=11 // pred_fallthru
        _
      // Predicated region
      $region29: #{convblock_forward.1} parent=11 // pred_check
        %p196 = pneg %p143
      $region30: #{convblock_forward.1} parent=11 // pred_check_branch
        %198 = sbr.rel (%p196) target = $region32
      $region31: #{convblock_forward.1} parent=11 // pred_region
        _
      $region32: #{convblock_forward.1} parent=11 // pred_fallthru
        _
    $region12: #{convblock_forward.1} parent=5 // pred_fallthru
      _
    %p199 = scmp.lt.s32.totalorder %s12, 2
    // Predicated region
    $region33: #{convblock_forward.1} parent=5 // pred_check
      %p200 = pneg %p199
    $region34: #{convblock_forward.1} parent=5 // pred_check_branch
      %202 = sbr.rel (%p200) target = $region36
    $region35: #{convblock_forward.1} parent=5 // pred_region
      // Predicated region
      $region37: #{convblock_forward.1} parent=35 // pred_check
        %p203 = pneg %p32
      $region38: #{convblock_forward.1} parent=35 // pred_check_branch
        %205 = sbr.rel (%p203) target = $region40
      $region39: #{convblock_forward.1} parent=35 // pred_region
        %p206 = scmp.lt.s32.totalorder %s12, 1
        %s207 = scalar_select %p206, %s12, 1
        %s208 = smul.addr %s207, 3
        %s209 = smul.addr %s208, 8
        %s210 = scalar_lea.vmem %s0, %s209
      $region40: #{convblock_forward.1} parent=35 // pred_fallthru
        _
    $region36: #{convblock_forward.1} parent=5 // pred_fallthru
      _
    %p211 = scmp.le.s32.totalorder 1, %s12
    %p212 = scmp.lt.s32.totalorder %s12, 3
    %p213 = pnand %p211, %p212
    %p214 = pneg %p213
    // Predicated region
    $region41: #{convblock_forward.1} parent=5 // pred_check
      _
    $region42: #{convblock_forward.1} parent=5 // pred_check_branch
      %216 = sbr.rel (%p213) target = $region44
    $region43: #{convblock_forward.1} parent=5 // pred_region
      %s217 = ssub.s32 %s12, 1
      %p218 = scmp.lt.s32.totalorder %s17, 1
      %s219 = scalar_select %p218, %s17, 1
      %s220 = smul.addr %s219, 3
      %s221 = smul.addr %s220, 8
      %s222 = scalar_lea.vmem %s0, %s221
      %p223 = pneg %p38
      %p224 = pneg %p35
      %p225 = pneg %p59
      %p226 = pneg %p56
      %p227 = pneg %p80
      %p228 = pneg %p77
      %p229 = pneg %p101
      %p230 = pneg %p98
      %p231 = pneg %p122
      %p232 = pneg %p119
      %p233 = pneg %p143
      %p234 = pneg %p140
      %p235 = pneg %p169
      %p236 = pneg %p166
      %p237 = scmp.lt.s32.totalorder %s17, 1
      %s238 = scalar_select %p237, %s17, 1
      %s239 = smul.addr %s238, 3
      %s240 = smul.addr %s239, 8
      %s241 = scalar_lea.vmem %s6, %s240
      %p242 = scmp.lt.s32.totalorder %s17, 1
      %s243 = scalar_select %p242, %s17, 1
      %s244 = smul.addr %s243, 3
      %s245 = smul.addr %s244, 8
      %s246 = scalar_lea.vmem %s0, %s245
      %p247 = scmp.lt.s32.totalorder %s17, 1
      %s248 = scalar_select %p247, %s17, 1
      %s249 = smul.addr %s248, 3
      %s250 = smul.addr %s249, 8
      %s251 = scalar_lea.vmem %s6, %s250
      %v252 = vld [vmem:[%s246] sm:$0xff]
      %v253 = vld [vmem:[%s246 + $0x8] sm:$0xff]
      %v254 = vld [vmem:[%s246 + $0x10] sm:$0xff]
      %258 = vrot.lane.b32.xlu0 %v252, 127
      %v259 = vpop.permute.xlu0 %258
      %260 = vrot.lane.b32.xlu0 %v253, 127
      %v261 = vpop.permute.xlu0 %260
      %262 = vrot.lane.b32.xlu0 %v254, 127
      %v263 = vpop.permute.xlu0 %262
      %vm264 = vcmask 1039360
      %v265 = vsel %vm264, %v259, %v261
      %v266 = vsel %vm264, %v261, %v263
      %270 = vrot.lane.b32.xlu0 %v252, 126
      %v271 = vpop.permute.xlu0 %270
      %272 = vrot.lane.b32.xlu0 %v253, 126
      %v273 = vpop.permute.xlu0 %272
      %274 = vrot.lane.b32.xlu0 %v254, 126
      %v275 = vpop.permute.xlu0 %274
      %vm276 = vcmask 1031168
      %v277 = vsel %vm276, %v271, %v273
      %v278 = vsel %vm276, %v273, %v275
      %282 = vrot.lane.b32.xlu0 %v252, 110
      %v283 = vpop.permute.xlu0 %282
      %284 = vrot.lane.b32.xlu0 %v253, 110
      %v285 = vpop.permute.xlu0 %284
      %286 = vrot.lane.b32.xlu0 %v254, 110
      %v287 = vpop.permute.xlu0 %286
      %vm288 = vcmask 900096
      %v289 = vsel %vm288, %v283, %v285
      %v290 = vsel %vm288, %v285, %v287
      %294 = vrot.lane.b32.xlu0 %v252, 109
      %v295 = vpop.permute.xlu0 %294
      %296 = vrot.lane.b32.xlu0 %v253, 109
      %v297 = vpop.permute.xlu0 %296
      %298 = vrot.lane.b32.xlu0 %v254, 109
      %v299 = vpop.permute.xlu0 %298
      %vm300 = vcmask 891904
      %v301 = vsel %vm300, %v295, %v297
      %v302 = vsel %vm300, %v297, %v299
      %306 = vrot.lane.b32.xlu0 %v252, 108
      %v307 = vpop.permute.xlu0 %306
      %308 = vrot.lane.b32.xlu0 %v253, 108
      %v309 = vpop.permute.xlu0 %308
      %310 = vrot.lane.b32.xlu0 %v254, 108
      %v311 = vpop.permute.xlu0 %310
      %vm312 = vcmask 883712
      %v313 = vsel %vm312, %v307, %v309
      %v314 = vsel %vm312, %v309, %v311
      %318 = vrot.lane.b32.xlu0 %v252, 92
      %v319 = vpop.permute.xlu0 %318
      %320 = vrot.lane.b32.xlu0 %v253, 92
      %v321 = vpop.permute.xlu0 %320
      %322 = vrot.lane.b32.xlu0 %v254, 92
      %v323 = vpop.permute.xlu0 %322
      %vm324 = vcmask 752640
      %v325 = vsel %vm324, %v319, %v321
      %v326 = vsel %vm324, %v321, %v323
      %330 = vrot.lane.b32.xlu0 %v252, 91
      %v331 = vpop.permute.xlu0 %330
      %332 = vrot.lane.b32.xlu0 %v253, 91
      %v333 = vpop.permute.xlu0 %332
      %334 = vrot.lane.b32.xlu0 %v254, 91
      %v335 = vpop.permute.xlu0 %334
      %vm336 = vcmask 744448
      %v337 = vsel %vm336, %v331, %v333
      %v338 = vsel %vm336, %v333, %v335
      %342 = vrot.lane.b32.xlu0 %v252, 90
      %v343 = vpop.permute.xlu0 %342
      %344 = vrot.lane.b32.xlu0 %v253, 90
      %v345 = vpop.permute.xlu0 %344
      %346 = vrot.lane.b32.xlu0 %v254, 90
      %v347 = vpop.permute.xlu0 %346
      %vm348 = vcmask 736256
      %v349 = vsel %vm348, %v343, %v345
      %v350 = vsel %vm348, %v345, %v347
      %v354 = vld [vmem:[%s1] sm:$0xff]
      %v355 = vld [vmem:[%s2] sm:$0xff]
      %357 = vset.pattern.permute.xlu0 0
      %358 = vperm.xlu0 %357, %v355
      %v359 = vpop.permute.xlu0 %358
      %vm361 = vcmask 588800
      %v363 = vsel %vm361, %v354, 0
      %365 = vmatprep.subr.mxu0 %v253
      %366 = vmatpush1.msra.mxu0 %v252
      %367 = vmatprep.subr.mxu0 %v266
      %368 = vmatpush1.msra.mxu0 %v265
      %369 = vmatprep.subr.mxu0 %v278
      %370 = vmatpush1.msra.mxu0 %v277
      %371 = vmatprep.subr.mxu0 %v290
      %372 = vmatpush1.msra.mxu0 %v289
      %373 = vmatprep.subr.mxu0 %v302
      %374 = vmatpush1.msra.mxu0 %v301
      %375 = vmatprep.subr.mxu0 %v314
      %376 = vmatpush1.msra.mxu0 %v313
      %377 = vmatprep.subr.mxu0 %v326
      %378 = vmatpush1.msra.mxu0 %v325
      %379 = vmatprep.subr.mxu0 %v338
      %380 = vmatpush1.msra.mxu0 %v337
      %381 = vmatprep.subr.mxu0 %v350
      %382 = vmatpush1.msra.mxu0 %v349
      %383 = vmatprep.subr.mxu0 0.0
      %384 = vmatpush1.msra.mxu0 0.0
      %385 = vmatprep.subr.mxu0 0.0
      %386 = vmatpush1.msra.mxu0 0.0
      %387 = vmatprep.subr.mxu0 0.0
      %388 = vmatpush1.msra.mxu0 0.0
      %389 = vmatprep.subr.mxu0 0.0
      %390 = vmatpush1.msra.mxu0 0.0
      %391 = vmatprep.subr.mxu0 0.0
      %392 = vmatpush1.msra.mxu0 0.0
      %393 = vmatprep.subr.mxu0 0.0
      %394 = vmatpush1.msra.mxu0 0.0
      %395 = vmatprep.subr.mxu0 0.0
      %396 = vmatpush1.msra.mxu0 0.0
      %397 = vmatprep.subr.mxu0 0.0
      %398 = vmatpush1.msra.mxu0 0.0
      %399 = vmatprep.subr.mxu0 0.0
      %400 = vmatpush1.msra.mxu0 0.0
      %401 = vmatprep.subr.mxu0 0.0
      %402 = vmatpush1.msra.mxu0 0.0
      %403 = vmatprep.subr.mxu0 0.0
      %404 = vmatpush1.msra.mxu0 0.0
      %405 = vmatprep.subr.mxu0 0.0
      %406 = vmatpush1.msra.mxu0 0.0
      %407 = vmatprep.subr.mxu0 0.0
      %408 = vmatpush1.msra.mxu0 0.0
      %409 = vmatprep.subr.mxu0 0.0
      %410 = vmatpush1.msra.mxu0 0.0
      %411 = vmatprep.subr.mxu0 0.0
      %412 = vmatpush1.msra.mxu0 0.0
      %413 = vmatprep.subr.mxu0 0.0
      %414 = vmatpush1.msra.mxu0 0.0
      %415 = vmatprep.subr.mxu0 0.0
      %416 = vmatpush1.msra.mxu0 0.0
      %417 = vmatprep.subr.mxu0 0.0
      %418 = vmatpush1.msra.mxu0 0.0
      %419 = vmatprep.subr.mxu0 0.0
      %420 = vmatpush1.msra.mxu0 0.0
      %421 = vmatprep.subr.mxu0 0.0
      %422 = vmatpush1.msra.mxu0 0.0
      %423 = vmatprep.subr.mxu0 0.0
      %424 = vmatpush1.msra.mxu0 0.0
      %425 = vmatprep.subr.mxu0 0.0
      %426 = vmatpush1.msra.mxu0 0.0
      %427 = vmatprep.subr.mxu0 0.0
      %428 = vmatpush1.msra.mxu0 0.0
      %429 = vmatprep.mubr.f32.mxu0 0.0
      %430 = vmatmul.mubr.f32.gmra.mrb[0].mxu0 %v363
      %v431 = vpop.f32.mrb[0].mxu0
      %v432 = vadd.f32 %v359, %v431
      %v433 = vpop.f32.mrb[0].mxu0
      %v434 = vadd.f32 %v359, %v433
      %435 = vdwg.mxu0
      %436 = vmatprep.subr.mxu0 0.0
      %437 = vmatpush1.msra.mxu0 %v254
      %438 = vmatprep.subr.mxu0 0.0
      %439 = vmatpush1.msra.mxu0 %v263
      %440 = vmatprep.subr.mxu0 0.0
      %441 = vmatpush1.msra.mxu0 %v275
      %442 = vmatprep.subr.mxu0 0.0
      %443 = vmatpush1.msra.mxu0 %v287
      %444 = vmatprep.subr.mxu0 0.0
      %445 = vmatpush1.msra.mxu0 %v299
      %446 = vmatprep.subr.mxu0 0.0
      %447 = vmatpush1.msra.mxu0 %v311
      %448 = vmatprep.subr.mxu0 0.0
      %449 = vmatpush1.msra.mxu0 %v323
      %450 = vmatprep.subr.mxu0 0.0
      %451 = vmatpush1.msra.mxu0 %v335
      %452 = vmatprep.subr.mxu0 0.0
      %453 = vmatpush1.msra.mxu0 %v347
      %454 = vmatprep.subr.mxu0 0.0
      %455 = vmatpush1.msra.mxu0 0.0
      %456 = vmatprep.subr.mxu0 0.0
      %457 = vmatpush1.msra.mxu0 0.0
      %458 = vmatprep.subr.mxu0 0.0
      %459 = vmatpush1.msra.mxu0 0.0
      %460 = vmatprep.subr.mxu0 0.0
      %461 = vmatpush1.msra.mxu0 0.0
      %462 = vmatprep.subr.mxu0 0.0
      %463 = vmatpush1.msra.mxu0 0.0
      %464 = vmatprep.subr.mxu0 0.0
      %465 = vmatpush1.msra.mxu0 0.0
      %466 = vmatprep.subr.mxu0 0.0
      %467 = vmatpush1.msra.mxu0 0.0
      %468 = vmatprep.subr.mxu0 0.0
      %469 = vmatpush1.msra.mxu0 0.0
      %470 = vmatprep.subr.mxu0 0.0
      %471 = vmatpush1.msra.mxu0 0.0
      %472 = vmatprep.subr.mxu0 0.0
      %473 = vmatpush1.msra.mxu0 0.0
      %474 = vmatprep.subr.mxu0 0.0
      %475 = vmatpush1.msra.mxu0 0.0
      %476 = vmatprep.subr.mxu0 0.0
      %477 = vmatpush1.msra.mxu0 0.0
      %478 = vmatprep.subr.mxu0 0.0
      %479 = vmatpush1.msra.mxu0 0.0
      %480 = vmatprep.subr.mxu0 0.0
      %481 = vmatpush1.msra.mxu0 0.0
      %482 = vmatprep.subr.mxu0 0.0
      %483 = vmatpush1.msra.mxu0 0.0
      %484 = vmatprep.subr.mxu0 0.0
      %485 = vmatpush1.msra.mxu0 0.0
      %486 = vmatprep.subr.mxu0 0.0
      %487 = vmatpush1.msra.mxu0 0.0
      %488 = vmatprep.subr.mxu0 0.0
      %489 = vmatpush1.msra.mxu0 0.0
      %490 = vmatprep.subr.mxu0 0.0
      %491 = vmatpush1.msra.mxu0 0.0
      %492 = vmatprep.subr.mxu0 0.0
      %493 = vmatpush1.msra.mxu0 0.0
      %494 = vmatprep.subr.mxu0 0.0
      %495 = vmatpush1.msra.mxu0 0.0
      %496 = vmatprep.subr.mxu0 0.0
      %497 = vmatpush1.msra.mxu0 0.0
      %498 = vmatprep.subr.mxu0 0.0
      %499 = vmatpush1.msra.mxu0 0.0
      %500 = vmatprep.mubr.f32.mxu0 0.0
      %501 = vmatmul.mubr.f32.gmra.mrb[0].mxu0 %v363
      %v502 = vpop.f32.mrb[0].mxu0
      %v503 = vadd.f32 %v359, %v502
      %v504 = vpop.f32.mrb[0].mxu0
      %505 = vdwg.mxu0
      %v506 = vmax.f32 %v432, 0.0
      %v507 = vmax.f32 %v434, 0.0
      %v508 = vmax.f32 %v503, 0.0
      %v509 = vld [vmem:[%s5] sm:$0x7]
      %v511 = vlaneseq
      %v512 = vshrl.u32 %v511, 7
      %v513 = vsub.s32 0, %v512
      %v514 = vrot.slane %v509, %v513
      %v515 = vlaneseq
      %v516 = vshrl.u32 %v515, 7
      %v517 = vsub.s32 1, %v516
      %v518 = vrot.slane %v509, %v517
      %v519 = vlaneseq
      %v520 = vshrl.u32 %v519, 7
      %v521 = vsub.s32 2, %v520
      %v522 = vrot.slane %v509, %v521
      %v526 = vmul.f32 %v506, %v514
      %v527 = vmul.f32 %v507, %v518
      %v528 = vmul.f32 %v508, %v522
      %532 = vrot.lane.b32.xlu0 %v526, 127
      %v533 = vpop.permute.xlu0 %532
      %534 = vrot.lane.b32.xlu0 %v527, 127
      %v535 = vpop.permute.xlu0 %534
      %536 = vrot.lane.b32.xlu0 %v528, 127
      %v537 = vpop.permute.xlu0 %536
      %v538 = vsel %vm264, %v533, %v535
      %v539 = vsel %vm264, %v535, %v537
      %543 = vrot.lane.b32.xlu0 %v526, 126
      %v544 = vpop.permute.xlu0 %543
      %545 = vrot.lane.b32.xlu0 %v527, 126
      %v546 = vpop.permute.xlu0 %545
      %547 = vrot.lane.b32.xlu0 %v528, 126
      %v548 = vpop.permute.xlu0 %547
      %v549 = vsel %vm276, %v544, %v546
      %v550 = vsel %vm276, %v546, %v548
      %554 = vrot.lane.b32.xlu0 %v526, 110
      %v555 = vpop.permute.xlu0 %554
      %556 = vrot.lane.b32.xlu0 %v527, 110
      %v557 = vpop.permute.xlu0 %556
      %558 = vrot.lane.b32.xlu0 %v528, 110
      %v559 = vpop.permute.xlu0 %558
      %v560 = vsel %vm288, %v555, %v557
      %v561 = vsel %vm288, %v557, %v559
      %565 = vrot.lane.b32.xlu0 %v526, 109
      %v566 = vpop.permute.xlu0 %565
      %567 = vrot.lane.b32.xlu0 %v527, 109
      %v568 = vpop.permute.xlu0 %567
      %569 = vrot.lane.b32.xlu0 %v528, 109
      %v570 = vpop.permute.xlu0 %569
      %v571 = vsel %vm300, %v566, %v568
      %v572 = vsel %vm300, %v568, %v570
      %576 = vrot.lane.b32.xlu0 %v526, 108
      %v577 = vpop.permute.xlu0 %576
      %578 = vrot.lane.b32.xlu0 %v527, 108
      %v579 = vpop.permute.xlu0 %578
      %580 = vrot.lane.b32.xlu0 %v528, 108
      %v581 = vpop.permute.xlu0 %580
      %v582 = vsel %vm312, %v577, %v579
      %v583 = vsel %vm312, %v579, %v581
      %587 = vrot.lane.b32.xlu0 %v526, 92
      %v588 = vpop.permute.xlu0 %587
      %589 = vrot.lane.b32.xlu0 %v527, 92
      %v590 = vpop.permute.xlu0 %589
      %591 = vrot.lane.b32.xlu0 %v528, 92
      %v592 = vpop.permute.xlu0 %591
      %v593 = vsel %vm324, %v588, %v590
      %v594 = vsel %vm324, %v590, %v592
      %598 = vrot.lane.b32.xlu0 %v526, 91
      %v599 = vpop.permute.xlu0 %598
      %600 = vrot.lane.b32.xlu0 %v527, 91
      %v601 = vpop.permute.xlu0 %600
      %602 = vrot.lane.b32.xlu0 %v528, 91
      %v603 = vpop.permute.xlu0 %602
      %v604 = vsel %vm336, %v599, %v601
      %v605 = vsel %vm336, %v601, %v603
      %609 = vrot.lane.b32.xlu0 %v526, 90
      %v610 = vpop.permute.xlu0 %609
      %611 = vrot.lane.b32.xlu0 %v527, 90
      %v612 = vpop.permute.xlu0 %611
      %613 = vrot.lane.b32.xlu0 %v528, 90
      %v614 = vpop.permute.xlu0 %613
      %v615 = vsel %vm348, %v610, %v612
      %v616 = vsel %vm348, %v612, %v614
      %v620 = vld [vmem:[%s3] sm:$0xff]
      %v621 = vld [vmem:[%s4] sm:$0xff]
      %623 = vset.pattern.permute.xlu0 0
      %624 = vperm.xlu0 %623, %v621
      %v625 = vpop.permute.xlu0 %624
      %v628 = vsel %vm361, %v620, 0
      %630 = vmatprep.subr.mxu0 %v527
      %631 = vmatpush1.msra.mxu0 %v526
      %632 = vmatprep.subr.mxu0 %v539
      %633 = vmatpush1.msra.mxu0 %v538
      %634 = vmatprep.subr.mxu0 %v550
      %635 = vmatpush1.msra.mxu0 %v549
      %636 = vmatprep.subr.mxu0 %v561
      %637 = vmatpush1.msra.mxu0 %v560
      %638 = vmatprep.subr.mxu0 %v572
      %639 = vmatpush1.msra.mxu0 %v571
      %640 = vmatprep.subr.mxu0 %v583
      %641 = vmatpush1.msra.mxu0 %v582
      %642 = vmatprep.subr.mxu0 %v594
      %643 = vmatpush1.msra.mxu0 %v593
      %644 = vmatprep.subr.mxu0 %v605
      %645 = vmatpush1.msra.mxu0 %v604
      %646 = vmatprep.subr.mxu0 %v616
      %647 = vmatpush1.msra.mxu0 %v615
      %648 = vmatprep.subr.mxu0 0.0
      %649 = vmatpush1.msra.mxu0 0.0
      %650 = vmatprep.subr.mxu0 0.0
      %651 = vmatpush1.msra.mxu0 0.0
      %652 = vmatprep.subr.mxu0 0.0
      %653 = vmatpush1.msra.mxu0 0.0
      %654 = vmatprep.subr.mxu0 0.0
      %655 = vmatpush1.msra.mxu0 0.0
      %656 = vmatprep.subr.mxu0 0.0
      %657 = vmatpush1.msra.mxu0 0.0
      %658 = vmatprep.subr.mxu0 0.0
      %659 = vmatpush1.msra.mxu0 0.0
      %660 = vmatprep.subr.mxu0 0.0
      %661 = vmatpush1.msra.mxu0 0.0
      %662 = vmatprep.subr.mxu0 0.0
      %663 = vmatpush1.msra.mxu0 0.0
      %664 = vmatprep.subr.mxu0 0.0
      %665 = vmatpush1.msra.mxu0 0.0
      %666 = vmatprep.subr.mxu0 0.0
      %667 = vmatpush1.msra.mxu0 0.0
      %668 = vmatprep.subr.mxu0 0.0
      %669 = vmatpush1.msra.mxu0 0.0
      %670 = vmatprep.subr.mxu0 0.0
      %671 = vmatpush1.msra.mxu0 0.0
      %672 = vmatprep.subr.mxu0 0.0
      %673 = vmatpush1.msra.mxu0 0.0
      %674 = vmatprep.subr.mxu0 0.0
      %675 = vmatpush1.msra.mxu0 0.0
      %676 = vmatprep.subr.mxu0 0.0
      %677 = vmatpush1.msra.mxu0 0.0
      %678 = vmatprep.subr.mxu0 0.0
      %679 = vmatpush1.msra.mxu0 0.0
      %680 = vmatprep.subr.mxu0 0.0
      %681 = vmatpush1.msra.mxu0 0.0
      %682 = vmatprep.subr.mxu0 0.0
      %683 = vmatpush1.msra.mxu0 0.0
      %684 = vmatprep.subr.mxu0 0.0
      %685 = vmatpush1.msra.mxu0 0.0
      %686 = vmatprep.subr.mxu0 0.0
      %687 = vmatpush1.msra.mxu0 0.0
      %688 = vmatprep.subr.mxu0 0.0
      %689 = vmatpush1.msra.mxu0 0.0
      %690 = vmatprep.subr.mxu0 0.0
      %691 = vmatpush1.msra.mxu0 0.0
      %692 = vmatprep.subr.mxu0 0.0
      %693 = vmatpush1.msra.mxu0 0.0
      %694 = vmatprep.mubr.f32.mxu0 0.0
      %695 = vmatmul.mubr.f32.gmra.mrb[0].mxu0 %v628
      %v696 = vpop.f32.mrb[0].mxu0
      %v697 = vadd.f32 %v625, %v696
      %v698 = vpop.f32.mrb[0].mxu0
      %v699 = vadd.f32 %v625, %v698
      %700 = vdwg.mxu0
      %701 = vmatprep.subr.mxu0 0.0
      %702 = vmatpush1.msra.mxu0 %v528
      %703 = vmatprep.subr.mxu0 0.0
      %704 = vmatpush1.msra.mxu0 %v537
      %705 = vmatprep.subr.mxu0 0.0
      %706 = vmatpush1.msra.mxu0 %v548
      %707 = vmatprep.subr.mxu0 0.0
      %708 = vmatpush1.msra.mxu0 %v559
      %709 = vmatprep.subr.mxu0 0.0
      %710 = vmatpush1.msra.mxu0 %v570
      %711 = vmatprep.subr.mxu0 0.0
      %712 = vmatpush1.msra.mxu0 %v581
      %713 = vmatprep.subr.mxu0 0.0
      %714 = vmatpush1.msra.mxu0 %v592
      %715 = vmatprep.subr.mxu0 0.0
      %716 = vmatpush1.msra.mxu0 %v603
      %717 = vmatprep.subr.mxu0 0.0
      %718 = vmatpush1.msra.mxu0 %v614
      %719 = vmatprep.subr.mxu0 0.0
      %720 = vmatpush1.msra.mxu0 0.0
      %721 = vmatprep.subr.mxu0 0.0
      %722 = vmatpush1.msra.mxu0 0.0
      %723 = vmatprep.subr.mxu0 0.0
      %724 = vmatpush1.msra.mxu0 0.0
      %725 = vmatprep.subr.mxu0 0.0
      %726 = vmatpush1.msra.mxu0 0.0
      %727 = vmatprep.subr.mxu0 0.0
      %728 = vmatpush1.msra.mxu0 0.0
      %729 = vmatprep.subr.mxu0 0.0
      %730 = vmatpush1.msra.mxu0 0.0
      %731 = vmatprep.subr.mxu0 0.0
      %732 = vmatpush1.msra.mxu0 0.0
      %733 = vmatprep.subr.mxu0 0.0
      %734 = vmatpush1.msra.mxu0 0.0
      %735 = vmatprep.subr.mxu0 0.0
      %736 = vmatpush1.msra.mxu0 0.0
      %737 = vmatprep.subr.mxu0 0.0
      %738 = vmatpush1.msra.mxu0 0.0
      %739 = vmatprep.subr.mxu0 0.0
      %740 = vmatpush1.msra.mxu0 0.0
      %741 = vmatprep.subr.mxu0 0.0
      %742 = vmatpush1.msra.mxu0 0.0
      %743 = vmatprep.subr.mxu0 0.0
      %744 = vmatpush1.msra.mxu0 0.0
      %745 = vmatprep.subr.mxu0 0.0
      %746 = vmatpush1.msra.mxu0 0.0
      %747 = vmatprep.subr.mxu0 0.0
      %748 = vmatpush1.msra.mxu0 0.0
      %749 = vmatprep.subr.mxu0 0.0
      %750 = vmatpush1.msra.mxu0 0.0
      %751 = vmatprep.subr.mxu0 0.0
      %752 = vmatpush1.msra.mxu0 0.0
      %753 = vmatprep.subr.mxu0 0.0
      %754 = vmatpush1.msra.mxu0 0.0
      %755 = vmatprep.subr.mxu0 0.0
      %756 = vmatpush1.msra.mxu0 0.0
      %757 = vmatprep.subr.mxu0 0.0
      %758 = vmatpush1.msra.mxu0 0.0
      %759 = vmatprep.subr.mxu0 0.0
      %760 = vmatpush1.msra.mxu0 0.0
      %761 = vmatprep.subr.mxu0 0.0
      %762 = vmatpush1.msra.mxu0 0.0
      %763 = vmatprep.subr.mxu0 0.0
      %764 = vmatpush1.msra.mxu0 0.0
      %765 = vmatprep.mubr.f32.mxu0 0.0
      %766 = vmatmul.mubr.f32.gmra.mrb[0].mxu0 %v628
      %v767 = vpop.f32.mrb[0].mxu0
      %v768 = vadd.f32 %v625, %v767
      %v769 = vpop.f32.mrb[0].mxu0
      %770 = vdwg.mxu0
      %v771 = vmax.f32 %v697, 0.0
      %v772 = vmax.f32 %v699, 0.0
      %v773 = vmax.f32 %v768, 0.0
      %774 = vst [vmem:[%s251] sm:$0xff] %v771
      %775 = vst [vmem:[%s251 + $0x8] sm:$0xff] %v772
      %vm776 = vcmask 261120
      %777 = vst.msk [vmem:[%s251 + $0x10] sm:$0xff] %vm776, %v773
      %p778 = scmp.lt.s32.totalorder %s17, 1
      %s779 = scalar_select %p778, %s17, 1
      %s780 = smul.addr %s779, 3
      %s781 = smul.addr %s780, 8
      %s782 = scalar_lea.vmem %s6, %s781
      // Predicated region
      $region45: #{convblock_forward.1} parent=43 // pred_check
        %p783 = pneg %p166
      $region46: #{convblock_forward.1} parent=43 // pred_check_branch
        %785 = sbr.rel (%p783) target = $region48
      $region47: #{convblock_forward.1} parent=43 // pred_region
        _
      $region48: #{convblock_forward.1} parent=43 // pred_fallthru
        _
    $region44: #{convblock_forward.1} parent=5 // pred_fallthru
      _
    %p786 = scmp.le.s32.totalorder 2, %s12
    // Predicated region
    $region49: #{convblock_forward.1} parent=5 // pred_check
      %p787 = pneg %p786
    $region50: #{convblock_forward.1} parent=5 // pred_check_branch
      %789 = sbr.rel (%p787) target = $region52
    $region51: #{convblock_forward.1} parent=5 // pred_region
      %s790 = ssub.s32 %s12, 2
      // Predicated region
      $region53: #{convblock_forward.1} parent=51 // pred_check
        %p791 = pneg %p172
      $region54: #{convblock_forward.1} parent=51 // pred_check_branch
        %793 = sbr.rel (%p791) target = $region56
      $region55: #{convblock_forward.1} parent=51 // pred_region
        %p794 = scmp.lt.s32.totalorder %s18, 1
        %s795 = scalar_select %p794, %s18, 1
        %s796 = smul.addr %s795, 3
        %s797 = smul.addr %s796, 8
        %s798 = scalar_lea.vmem %s6, %s797
      $region56: #{convblock_forward.1} parent=51 // pred_fallthru
        _
    $region52: #{convblock_forward.1} parent=5 // pred_fallthru
      _
  $region6: #{convblock_forward.1} parent=0 // loop_footer
    %s16 = sadd.s32 1, %s12
  $region7: #{convblock_forward.1} parent=0 // loop_footer_branch
    %11 = sbr.rel target = $region3
  $region8: #{convblock_forward.1} parent=0 // loop_exit
    _

</llo_original>
